<compile_context>
chip_gen: v7x
topology: tpu7x:2x2x1
jax: 0.10.0
libtpu: 0.0.40
codegen_flags: <defaults>
</compile_context>

<pallas_src>
import functools

import jax
import jax.numpy as jnp
from jax.experimental import pallas as pl
from jax.experimental.pallas import tpu as pltpu


# ---------------------------------------------------------------------------
# In-kernel building blocks
# ---------------------------------------------------------------------------

def _pool_block(x_ref, cw, ct, valid=None):
    """Sum & max over the spatial (lane) axis of one (1, C, HW_blk) block.

    Returns (sum, max), each (C, 1) float32.  `valid` (traced scalar or None)
    masks off lanes >= valid (used when the HW block overruns the array).
    HW is walked in `cw`-lane chunks with fori_loop (bounded code size / live
    ranges); C is walked in `ct`-row sub-tiles so the accumulators stay small.
    """
    C, HW = x_ref.shape[1], x_ref.shape[2]
    n_full = HW // cw
    tail = HW - n_full * cw
    unroll = min(4, n_full) if n_full else 1

    sums, maxs = [], []
    for c0 in range(0, C, ct):
        csz = min(ct, C - c0)
        if n_full > 0:
            lane = jax.lax.broadcasted_iota(jnp.int32, (csz, cw), 1)  # hoisted

            def body(i, carry):
                s, m = carry
                off = i * cw
                off_h = pl.multiple_of(off, cw)
                chunk = x_ref[0, c0:c0 + csz, pl.ds(off_h, cw)].astype(jnp.float32)
                if valid is not None:
                    ok = lane < (valid - off)
                    s = s + jnp.where(ok, chunk, 0.0)
                    m = jnp.maximum(m, jnp.where(ok, chunk, -jnp.inf))
                else:
                    s = s + chunk
                    m = jnp.maximum(m, chunk)
                return s, m

            s, m = jax.lax.fori_loop(
                0, n_full, body,
                (jnp.zeros((csz, cw), jnp.float32),
                 jnp.full((csz, cw), -jnp.inf, jnp.float32)),
                unroll=unroll)
            t_sum = jnp.sum(s, axis=-1, keepdims=True)
            t_max = jnp.max(m, axis=-1, keepdims=True)
        else:
            t_sum = jnp.zeros((csz, 1), jnp.float32)
            t_max = jnp.full((csz, 1), -jnp.inf, jnp.float32)

        if tail > 0:  # static remainder chunk (HW_blk % cw)
            xt = x_ref[0, c0:c0 + csz, n_full * cw:HW].astype(jnp.float32)
            if valid is not None:
                lane_t = jax.lax.broadcasted_iota(jnp.int32, (csz, tail), 1)
                ok = lane_t < (valid - n_full * cw)
                xt_s = jnp.where(ok, xt, 0.0)
                xt_m = jnp.where(ok, xt, -jnp.inf)
            else:
                xt_s = xt
                xt_m = xt
            t_sum = t_sum + jnp.sum(xt_s, axis=-1, keepdims=True)
            t_max = jnp.maximum(t_max, jnp.max(xt_m, axis=-1, keepdims=True))

        sums.append(t_sum)
        maxs.append(t_max)

    sum_c1 = sums[0] if len(sums) == 1 else jnp.concatenate(sums, axis=0)
    max_c1 = maxs[0] if len(maxs) == 1 else jnp.concatenate(maxs, axis=0)
    return sum_c1, max_c1


def _scale_block(x_ref, o_ref, scale_c1, cw, ct):
    """o = scale * x (f32 multiply, cast once), lane-dense chunked stores."""
    C, HW = x_ref.shape[1], x_ref.shape[2]
    n_full = HW // cw
    tail = HW - n_full * cw
    unroll = min(4, n_full) if n_full else 1

    for c0 in range(0, C, ct):
        csz = min(ct, C - c0)
        s_rows = scale_c1[c0:c0 + csz, :]                       # (csz, 1) f32
        if n_full > 0:
            s_b = jnp.broadcast_to(s_rows, (csz, cw))           # hoisted out of loop

            def body(i, c):
                off_h = pl.multiple_of(i * cw, cw)
                xc = x_ref[0, c0:c0 + csz, pl.ds(off_h, cw)].astype(jnp.float32)
                o_ref[0, c0:c0 + csz, pl.ds(off_h, cw)] = (xc * s_b).astype(o_ref.dtype)
                return c

            jax.lax.fori_loop(0, n_full, body, 0, unroll=unroll)
        if tail > 0:
            xc = x_ref[0, c0:c0 + csz, n_full * cw:HW].astype(jnp.float32)
            o_ref[0, c0:c0 + csz, n_full * cw:HW] = (xc * s_rows).astype(o_ref.dtype)


def _excitation_scale(avg_c1, max_c1, w1, w2):
    """scale = sigmoid(fc(avg) + fc(max)); fc = sigmoid(W2 @ mish(W1 @ v))."""
    pooled = jnp.concatenate([avg_c1, max_c1], axis=-1)                   # (C, 2)
    w1 = w1.astype(jnp.float32)                                           # (Cr, C)
    w2 = w2.astype(jnp.float32)                                           # (C, Cr)
    h = jnp.dot(w1, pooled, preferred_element_type=jnp.float32)           # (Cr, 2)
    h = h * jnp.tanh(jax.nn.softplus(h))                                  # Mish
    y = jax.nn.sigmoid(jnp.dot(w2, h, preferred_element_type=jnp.float32))  # (C, 2)
    return jax.nn.sigmoid(y[:, 0:1] + y[:, 1:2])                          # (C, 1)


# ---------------------------------------------------------------------------
# Kernels
# ---------------------------------------------------------------------------

def _ca_fused_kernel(x_ref, w1_ref, w2_ref, o_ref, *, cw, ct):
    # Single-pass: x block stays in VMEM; pool + excitation + scale fused.
    HW = x_ref.shape[2]
    sum_c1, max_c1 = _pool_block(x_ref, cw, ct)
    avg_c1 = sum_c1 * (1.0 / float(HW))
    scale = _excitation_scale(avg_c1, max_c1, w1_ref[...], w2_ref[...])
    _scale_block(x_ref, o_ref, scale, cw, ct)


def _ca_pool_kernel(x_ref, pooled_ref, acc_s_ref, acc_m_ref, *, cw, ct,
                    hw_total, hw_tile):
    # Two-pass, pass 1: accumulate sum/max over HW tiles (grid axis 1).
    t = pl.program_id(1)

    @pl.when(t == 0)
    def _():
        acc_s_ref[...] = jnp.zeros_like(acc_s_ref)
        acc_m_ref[...] = jnp.full_like(acc_m_ref, -jnp.inf)

    valid = hw_total - t * hw_tile          # in-bounds lanes of this HW block
    sum_c1, max_c1 = _pool_block(x_ref, cw, ct, valid=valid)
    acc_s_ref[...] = acc_s_ref[...] + sum_c1
    acc_m_ref[...] = jnp.maximum(acc_m_ref[...], max_c1)

    @pl.when(t == pl.num_programs(1) - 1)
    def _():
        pooled_ref[0, :, 0:1] = acc_s_ref[...] * (1.0 / float(hw_total))
        pooled_ref[0, :, 1:2] = acc_m_ref[...]


def _ca_scale_kernel(s_ref, x_ref, o_ref, *, cw, ct):
    # Two-pass, pass 2: out = scale * x over an HW-tiled, fully parallel grid.
    _scale_block(x_ref, o_ref, s_ref[0], cw, ct)


# ---------------------------------------------------------------------------
# Wrappers
# ---------------------------------------------------------------------------

def _vmem_capacity_bytes():
    try:
        cap = getattr(pltpu.get_tpu_info(), "vmem_capacity_bytes", None)
        if cap:
            return int(cap)
    except Exception:
        pass
    return 64 << 20   # conservative fallback (v7x-sized); never overshoots


def _channel_attention_fused(x3, fc1_w, fc2_w, cw, ct, itemsize, vmem_cap, vmem_need):
    B, C, HW = x3.shape
    Cr = fc1_w.shape[0]
    w_bytes = (fc1_w.size * jnp.dtype(fc1_w.dtype).itemsize
               + fc2_w.size * jnp.dtype(fc2_w.dtype).itemsize)
    cost = pl.CostEstimate(
        flops=int(B * (3 * C * HW + 8 * C * Cr)),
        transcendentals=int(B * (6 * Cr + 3 * C)),
        bytes_accessed=int(2 * B * C * HW * itemsize + w_bytes),
    )
    kernel = functools.partial(_ca_fused_kernel, cw=cw, ct=ct)
    return pl.pallas_call(
        kernel,
        out_shape=jax.ShapeDtypeStruct((B, C, HW), x3.dtype),
        grid=(B,),
        in_specs=[
            pl.BlockSpec((1, C, HW), lambda b: (b, 0, 0)),
            pl.BlockSpec((Cr, C), lambda b: (0, 0)),   # VMEM-resident weights
            pl.BlockSpec((C, Cr), lambda b: (0, 0)),
        ],
        out_specs=pl.BlockSpec((1, C, HW), lambda b: (b, 0, 0)),
        compiler_params=pltpu.CompilerParams(
            dimension_semantics=("parallel",),
            vmem_limit_bytes=int(min(max(vmem_need, 32 << 20), vmem_cap)),
        ),
        cost_estimate=cost,
    )(x3, fc1_w, fc2_w)


def _channel_attention_two_pass(x3, fc1_w, fc2_w, cw, ct, itemsize, vmem_cap, hw_tile):
    B, C, HW = x3.shape
    if hw_tile is None:
        budget = max(vmem_cap - (8 << 20), 8 << 20)
        hw_tile = budget // (4 * C * itemsize)        # pass-2: 2x dbl-buffered in+out
    hw_tile = max(cw, (int(hw_tile) // cw) * cw)
    hw_tile = min(hw_tile, pl.cdiv(HW, cw) * cw)
    n_tiles = pl.cdiv(HW, hw_tile)

    # ---- pass 1: per-batch [sum | max] over HW, accumulated across HW tiles.
    pool_kernel = functools.partial(_ca_pool_kernel, cw=cw, ct=ct,
                                    hw_total=HW, hw_tile=hw_tile)
    pooled = pl.pallas_call(
        pool_kernel,
        out_shape=jax.ShapeDtypeStruct((B, C, 2), jnp.float32),
        grid=(B, n_tiles),
        in_specs=[pl.BlockSpec((1, C, hw_tile), lambda b, t: (b, 0, t))],
        out_specs=pl.BlockSpec((1, C, 2), lambda b, t: (b, 0, 0)),
        scratch_shapes=[pltpu.VMEM((C, 1), jnp.float32),
                        pltpu.VMEM((C, 1), jnp.float32)],
        compiler_params=pltpu.CompilerParams(
            dimension_semantics=("parallel", "arbitrary"),
            vmem_limit_bytes=vmem_cap,
        ),
    )(x3)

    # ---- excitation on the tiny pooled tensor, batched over B (plain JAX).
    avg = pooled[:, :, 0]
    mx = pooled[:, :, 1]
    w1 = fc1_w.astype(jnp.float32)
    w2 = fc2_w.astype(jnp.float32)

    def fc(v):
        h = v @ w1.T
        h = h * jnp.tanh(jax.nn.softplus(h))
        return jax.nn.sigmoid(h @ w2.T)

    scales = jax.nn.sigmoid(fc(avg) + fc(mx))[:, :, None]       # (B, C, 1) f32

    # ---- pass 2: out = scale * x, HW-tiled, both grid axes parallel.
    scale_kernel = functools.partial(_ca_scale_kernel, cw=cw, ct=ct)
    return pl.pallas_call(
        scale_kernel,
        out_shape=jax.ShapeDtypeStruct((B, C, HW), x3.dtype),
        grid=(B, n_tiles),
        in_specs=[pl.BlockSpec((1, C, 1), lambda b, t: (b, 0, 0)),
                  pl.BlockSpec((1, C, hw_tile), lambda b, t: (b, 0, t))],
        out_specs=pl.BlockSpec((1, C, hw_tile), lambda b, t: (b, 0, t)),
        compiler_params=pltpu.CompilerParams(
            dimension_semantics=("parallel", "parallel"),
            vmem_limit_bytes=vmem_cap,
        ),
    )(scales, x3)


def channel_attention(x_nchw, fc1_w, fc2_w, *, force_two_pass=False, hw_tile=None):
    """ChannelAttention forward.

    x_nchw: (B, C, H, W)
    fc1_w : (C//r, C)  = torch Linear(C, C//r, bias=False).weight
    fc2_w : (C, C//r)  = torch Linear(C//r, C, bias=False).weight
    """
    B, C, H, W = x_nchw.shape
    HW = H * W
    x3 = x_nchw.reshape(B, C, HW)
    itemsize = jnp.dtype(x3.dtype).itemsize

    # Inner-loop chunk width (lanes) & channel sub-tile (rows): keep the two
    # pool accumulators (2 * ct * cw f32) at ~16 vregs.
    cw = 512 if (HW % 512 == 0 and C <= 256) else 128
    ct = max(1, min(C, 8192 // cw))

    w_bytes = (fc1_w.size * jnp.dtype(fc1_w.dtype).itemsize
               + fc2_w.size * jnp.dtype(fc2_w.dtype).itemsize)
    vmem_cap = int(_vmem_capacity_bytes() * 0.85)   # ~54 MiB v7x, ~108 MiB v5e/v6e
    block_bytes = C * HW * itemsize
    # 2x double-buffered (1,C,HW) input + output blocks, resident weights, slack.
    single_need = 4 * block_bytes + 2 * w_bytes + (4 << 20)

    if force_two_pass or single_need > vmem_cap:
        out3 = _channel_attention_two_pass(x3, fc1_w, fc2_w, cw, ct, itemsize,
                                           vmem_cap, hw_tile)
    else:
        out3 = _channel_attention_fused(x3, fc1_w, fc2_w, cw, ct, itemsize,
                                        vmem_cap, single_need)
    return out3.reshape(B, C, H, W)


# ---------------------------------------------------------------------------
# Reference + test
# ---------------------------------------------------------------------------

def _reference(x_nchw, fc1_w, fc2_w):
    avg = jnp.mean(x_nchw, axis=(2, 3))
    mx = jnp.max(x_nchw, axis=(2, 3))

    def fc(v):
        h = v @ fc1_w.T
        h = h * jnp.tanh(jax.nn.softplus(h))
        return jax.nn.sigmoid(h @ fc2_w.T)

    scale = jax.nn.sigmoid(fc(avg) + fc(mx))
    return scale[:, :, None, None] * x_nchw


if __name__ == "__main__":
    key = jax.random.PRNGKey(0)
    kx1, kx2, k1, k2 = jax.random.split(key, 4)

    B, C, H, W = 2, 8, 16, 16                 # HW = 256 -> chunked fast path
    reduction_ratio = 4
    Cr = C // reduction_ratio

    bound1 = 1.0 / (C ** 0.5)
    bound2 = 1.0 / (Cr ** 0.5)
    fc1_w = jax.random.uniform(k1, (Cr, C), jnp.float32, -bound1, bound1)
    fc2_w = jax.random.uniform(k2, (C, Cr), jnp.float32, -bound2, bound2)

    # 1) fused single-pass path (block fits VMEM).
    x = jax.random.normal(kx1, (B, C, H, W), dtype=jnp.float32)
    out = channel_attention(x, fc1_w, fc2_w)
    jax.block_until_ready(out)
    assert out.shape == x.shape
    assert jnp.allclose(out, _reference(x, fc1_w, fc2_w), atol=1e-5, rtol=1e-5), \
        "fused path mismatch"

    # 2) ragged HW (=160, not a multiple of 128): exercises the static tail chunk.
    x_r = jax.random.normal(kx2, (B, C, 16, 10), dtype=jnp.float32)
    out_r = channel_attention(x_r, fc1_w, fc2_w)
    jax.block_until_ready(out_r)
    assert jnp.allclose(out_r, _reference(x_r, fc1_w, fc2_w), atol=1e-5, rtol=1e-5), \
        "fused tail path mismatch"

    # 3) two-pass fallback (pool -> batched excitation -> scale), forced with a
    #    small HW tile so cross-tile accumulation + ragged-tile masking runs.
    out_tp = channel_attention(x_r, fc1_w, fc2_w, force_two_pass=True, hw_tile=128)
    jax.block_until_ready(out_tp)
    assert jnp.allclose(out_tp, _reference(x_r, fc1_w, fc2_w), atol=1e-5, rtol=1e-5), \
        "two-pass path mismatch"

    print("KERNEL_OK")
</pallas_src>

<mosaic_0001>
module attributes {stable_mosaic.version = 11 : i64} {
  func.func @_ca_fused_kernel(%arg0: i32, %arg1: memref<1x8x256xf32, #tpu.memory_space<vmem>>, %arg2: memref<2x8xf32, #tpu.memory_space<vmem>>, %arg3: memref<8x2xf32, #tpu.memory_space<vmem>>, %arg4: memref<1x8x256xf32, #tpu.memory_space<vmem>>) attributes {dimension_semantics = [#tpu.dimension_semantics<parallel>], iteration_bounds = array<i64: 2>, scalar_prefetch = 0 : i64, scratch_operands = 0 : i64, tpu.core_type = #tpu.core_type<tc>, window_params = [{transform_indices = @transform_0, window_bounds = array<i64: 1, 8, 256>}, {pipeline_mode = #tpu.pipeline_mode<synchronous>, transform_indices = @transform_1, window_bounds = array<i64: 2, 8>}, {pipeline_mode = #tpu.pipeline_mode<synchronous>, transform_indices = @transform_2, window_bounds = array<i64: 8, 2>}, {transform_indices = @transform_3, window_bounds = array<i64: 1, 8, 256>}]} {
    %cst = arith.constant 0.000000e+00 : f32
    %0 = vector.broadcast %cst : f32 to vector<8x128xf32>
    %cst_0 = arith.constant 0xFF800000 : f32
    %1 = vector.broadcast %cst_0 : f32 to vector<8x128xf32>
    %c0_i32 = arith.constant 0 : i32
    %c128_i32 = arith.constant 128 : i32
    %2 = arith.muli %c0_i32, %c128_i32 : i32
    %3 = tpu.assume_multiple %2, 128 : i32
    %c0 = arith.constant 0 : index
    %c0_1 = arith.constant 0 : index
    %4 = arith.index_cast %3 : i32 to index
    %5 = vector.load %arg1[%c0, %c0_1, %4] : memref<1x8x256xf32, #tpu.memory_space<vmem>>, vector<1x8x128xf32>
    %6 = vector.shape_cast %5 : vector<1x8x128xf32> to vector<8x128xf32>
    %7 = arith.addf %0, %6 : vector<8x128xf32>
    %8 = arith.maximumf %1, %6 : vector<8x128xf32>
    %c1_i32 = arith.constant 1 : i32
    %c128_i32_2 = arith.constant 128 : i32
    %9 = arith.muli %c1_i32, %c128_i32_2 : i32
    %10 = tpu.assume_multiple %9, 128 : i32
    %c0_3 = arith.constant 0 : index
    %c0_4 = arith.constant 0 : index
    %11 = arith.index_cast %10 : i32 to index
    %12 = vector.load %arg1[%c0_3, %c0_4, %11] : memref<1x8x256xf32, #tpu.memory_space<vmem>>, vector<1x8x128xf32>
    %13 = vector.shape_cast %12 : vector<1x8x128xf32> to vector<8x128xf32>
    %14 = arith.addf %7, %13 : vector<8x128xf32>
    %15 = arith.maximumf %8, %13 : vector<8x128xf32>
    %c2_i32 = arith.constant 2 : i32
    %cst_5 = arith.constant dense<0.000000e+00> : vector<8xf32>
    %16 = vector.multi_reduction <add>, %14, %cst_5 [1] : vector<8x128xf32> to vector<8xf32>
    %17 = vector.shape_cast %16 : vector<8xf32> to vector<8x1xf32>
    %cst_6 = arith.constant dense<0xFF800000> : vector<8xf32>
    %18 = vector.multi_reduction <maximumf>, %15, %cst_6 [1] : vector<8x128xf32> to vector<8xf32>
    %19 = vector.shape_cast %18 : vector<8xf32> to vector<8x1xf32>
    %cst_7 = arith.constant 3.906250e-03 : f32
    %20 = vector.broadcast %cst_7 : f32 to vector<8x1xf32>
    %21 = arith.mulf %17, %20 : vector<8x1xf32>
    %c0_8 = arith.constant 0 : index
    %c0_9 = arith.constant 0 : index
    %22 = vector.load %arg2[%c0_8, %c0_9] : memref<2x8xf32, #tpu.memory_space<vmem>>, vector<2x8xf32>
    %c0_10 = arith.constant 0 : index
    %c0_11 = arith.constant 0 : index
    %23 = vector.load %arg3[%c0_10, %c0_11] : memref<8x2xf32, #tpu.memory_space<vmem>>, vector<8x2xf32>
    %24 = tpu.concatenate %21, %19 in 1 : vector<8x1xf32>, vector<8x1xf32> -> vector<8x2xf32>
    %cst_12 = arith.constant dense<0.000000e+00> : vector<2x2xf32>
    %25 = tpu.matmul %22, %24, %cst_12 {dimension_numbers = #tpu.dot_dimension_numbers<[1], [0], [0], [1], [0, 0, 1, 1], [], []>} : vector<2x8xf32>, vector<8x2xf32>, vector<2x2xf32> -> vector<2x2xf32>
    %cst_13 = arith.constant 0.000000e+00 : f32
    %26 = vector.broadcast %cst_13 : f32 to vector<2x2xf32>
    %27 = arith.maximumf %25, %26 : vector<2x2xf32>
    %28 = vector.broadcast %cst_13 : f32 to vector<2x2xf32>
    %29 = arith.subf %25, %28 : vector<2x2xf32>
    %30 = arith.cmpf one, %29, %29 : vector<2x2xf32>
    %31 = vector.broadcast %cst_13 : f32 to vector<2x2xf32>
    %32 = arith.addf %25, %31 : vector<2x2xf32>
    %33 = math.absf %29 : vector<2x2xf32>
    %cst_14 = arith.constant 0.000000e+00 : f32
    %34 = vector.broadcast %cst_14 : f32 to vector<2x2xf32>
    %35 = arith.subf %34, %33 : vector<2x2xf32>
    %36 = math.exp %35 : vector<2x2xf32>
    %37 = math.log1p %36 : vector<2x2xf32>
    %38 = arith.addf %27, %37 : vector<2x2xf32>
    %39 = arith.select %30, %32, %38 : vector<2x2xi1>, vector<2x2xf32>
    %40 = math.tanh %39 : vector<2x2xf32>
    %41 = arith.mulf %25, %40 : vector<2x2xf32>
    %cst_15 = arith.constant dense<0.000000e+00> : vector<8x2xf32>
    %42 = tpu.matmul %23, %41, %cst_15 {dimension_numbers = #tpu.dot_dimension_numbers<[1], [0], [0], [1], [0, 0, 1, 1], [], []>} : vector<8x2xf32>, vector<2x2xf32>, vector<8x2xf32> -> vector<8x2xf32>
    %43 = arith.negf %42 : vector<8x2xf32>
    %44 = math.exp %43 : vector<8x2xf32>
    %cst_16 = arith.constant 1.000000e+00 : f32
    %45 = vector.broadcast %cst_16 : f32 to vector<8x2xf32>
    %46 = arith.addf %45, %44 : vector<8x2xf32>
    %47 = arith.divf %45, %46 : vector<8x2xf32>
    %48 = vector.extract_strided_slice %47 {offsets = [0, 0], sizes = [8, 1], strides = [1, 1]} : vector<8x2xf32> to vector<8x1xf32>
    %49 = vector.extract_strided_slice %47 {offsets = [0, 1], sizes = [8, 1], strides = [1, 1]} : vector<8x2xf32> to vector<8x1xf32>
    %50 = arith.addf %48, %49 : vector<8x1xf32>
    %51 = arith.negf %50 : vector<8x1xf32>
    %52 = math.exp %51 : vector<8x1xf32>
    %cst_17 = arith.constant 1.000000e+00 : f32
    %53 = vector.broadcast %cst_17 : f32 to vector<8x1xf32>
    %54 = arith.addf %53, %52 : vector<8x1xf32>
    %55 = arith.divf %53, %54 : vector<8x1xf32>
    %56 = vector.shape_cast %55 : vector<8x1xf32> to vector<8x1xf32>
    %57 = vector.broadcast %56 : vector<8x1xf32> to vector<8x128xf32>
    %c0_i32_18 = arith.constant 0 : i32
    %c128_i32_19 = arith.constant 128 : i32
    %58 = arith.muli %c0_i32_18, %c128_i32_19 : i32
    %59 = tpu.assume_multiple %58, 128 : i32
    %c0_20 = arith.constant 0 : index
    %c0_21 = arith.constant 0 : index
    %60 = arith.index_cast %59 : i32 to index
    %61 = vector.load %arg1[%c0_20, %c0_21, %60] : memref<1x8x256xf32, #tpu.memory_space<vmem>>, vector<1x8x128xf32>
    %62 = vector.shape_cast %61 : vector<1x8x128xf32> to vector<8x128xf32>
    %63 = arith.mulf %62, %57 : vector<8x128xf32>
    %c0_22 = arith.constant 0 : index
    %c0_23 = arith.constant 0 : index
    %64 = arith.index_cast %59 : i32 to index
    %65 = vector.load %arg4[%c0_22, %c0_23, %64] : memref<1x8x256xf32, #tpu.memory_space<vmem>>, vector<1x8x128xf32>
    %66 = vector.shape_cast %65 : vector<1x8x128xf32> to vector<8x128xf32>
    %67 = vector.shape_cast %63 : vector<8x128xf32> to vector<1x8x128xf32>
    tpu.vector_store %arg4[%c0_22, %c0_23, %64], %67 {strides = array<i32>} : memref<1x8x256xf32, #tpu.memory_space<vmem>>, vector<1x8x128xf32>,
    %c1_i32_24 = arith.constant 1 : i32
    %c128_i32_25 = arith.constant 128 : i32
    %68 = arith.muli %c1_i32_24, %c128_i32_25 : i32
    %69 = tpu.assume_multiple %68, 128 : i32
    %c0_26 = arith.constant 0 : index
    %c0_27 = arith.constant 0 : index
    %70 = arith.index_cast %69 : i32 to index
    %71 = vector.load %arg1[%c0_26, %c0_27, %70] : memref<1x8x256xf32, #tpu.memory_space<vmem>>, vector<1x8x128xf32>
    %72 = vector.shape_cast %71 : vector<1x8x128xf32> to vector<8x128xf32>
    %73 = arith.mulf %72, %57 : vector<8x128xf32>
    %c0_28 = arith.constant 0 : index
    %c0_29 = arith.constant 0 : index
    %74 = arith.index_cast %69 : i32 to index
    %75 = vector.load %arg4[%c0_28, %c0_29, %74] : memref<1x8x256xf32, #tpu.memory_space<vmem>>, vector<1x8x128xf32>
    %76 = vector.shape_cast %75 : vector<1x8x128xf32> to vector<8x128xf32>
    %77 = vector.shape_cast %73 : vector<8x128xf32> to vector<1x8x128xf32>
    tpu.vector_store %arg4[%c0_28, %c0_29, %74], %77 {strides = array<i32>} : memref<1x8x256xf32, #tpu.memory_space<vmem>>, vector<1x8x128xf32>,
    %c2_i32_30 = arith.constant 2 : i32
    return
  }
  func.func @transform_0(%arg0: i32) -> (i32, i32, i32) {
    %c0_i32 = arith.constant 0 : i32
    %c0_i32_0 = arith.constant 0 : i32
    %c0_i32_1 = arith.constant 0 : i32
    return %arg0, %c0_i32, %c0_i32_0 : i32, i32, i32
  }
  func.func @transform_1(%arg0: i32) -> (i32, i32) {
    %c0_i32 = arith.constant 0 : i32
    %c0_i32_0 = arith.constant 0 : i32
    %c0_i32_1 = arith.constant 0 : i32
    return %c0_i32, %c0_i32_0 : i32, i32
  }
  func.func @transform_2(%arg0: i32) -> (i32, i32) {
    %c0_i32 = arith.constant 0 : i32
    %c0_i32_0 = arith.constant 0 : i32
    %c0_i32_1 = arith.constant 0 : i32
    return %c0_i32, %c0_i32_0 : i32, i32
  }
  func.func @transform_3(%arg0: i32) -> (i32, i32, i32) {
    %c0_i32 = arith.constant 0 : i32
    %c0_i32_0 = arith.constant 0 : i32
    %c0_i32_1 = arith.constant 0 : i32
    return %arg0, %c0_i32, %c0_i32_0 : i32, i32, i32
  }
}

</mosaic_0001>

<llo_original>
// kernel: tpu_custom_call.1
$region0: #{tpu_custom_call.1}
  #allocation0 [shape = 'u32[]', space=smem, size = 0x4, offset = 0x4, fixed_abs, tag = 'smem constant byte address 0x4 - core index']
  #allocation1 [shape = 'u32[144,128]{1,0:T(1,128)}', space=vmem, size = 0x12000, scoped, tag = 'internal scratch']
  %s0 = inlined_call_operand.hbm [shape: f32[2,8,256], index: 0, kind: input, shape index: {}]
  %s1 = inlined_call_operand.vmem [shape: f32[2,8], index: 1, kind: input, shape index: {}]
  %s2 = inlined_call_operand.vmem [shape: f32[8,2], index: 2, kind: input, shape index: {}]
  %s3 = inlined_call_operand.hbm [shape: f32[2,8,256], index: 3, kind: output, shape index: {}]
  %s4 = sld [smem:[#allocation0]]
  $region49: #{tpu_custom_call.1} parent=0
    _
  %s6 = ssub.s32 1, %s4
  %s7 = scalar_select 0, %s6, %s4
  $region1: #{tpu_custom_call.1} parent=0
    #allocation2 [shape = 'u8[16384]{0}', space=vmem, size = 0x4000, scoped, tag = 'input window, operand 0']
    #allocation3 [shape = 's32[2]{0}', space=sflag, size = 0x8, scoped, tag = 'scoped memory for tpu_custom_call.1']
    #allocation4 [shape = 's32[2]{0}', space=sflag, size = 0x8, scoped, tag = 'scoped memory for tpu_custom_call.1']
    #allocation5 [shape = 'u8[16384]{0}', space=vmem, size = 0x4000, scoped, tag = 'output window, operand 0']
    %8 = vsyncpa [#allocation3], 0
    %s9 = scalar_lea.sflag [#allocation3], 1
    %10 = vsyncpa %s9, 0
    %11 = vsyncpa [#allocation4], 0
    %s12 = scalar_lea.sflag [#allocation4], 1
    %13 = vsyncpa %s12, 0
    loop: start=0, step=1, limit=4
    $region2: #{tpu_custom_call.1} parent=1 // loop_pre_header
      _
    $region3: #{tpu_custom_call.1} parent=1 // loop_header
      %s15 = sphi 0, %s19
      %p16 = scmp.ge.s32.totalorder %s15, 4
      %s25 = sphi 0, %s27
      %s28 = sphi 0, %s25
      %s29 = sphi 0, %s28
      %s45 = sphi 0, %s29
      %s49 = sphi 0, %s49
      %s51 = sphi 0, %s49
      %s52 = sphi 0, %s51
      %s66 = sphi 0, %s52
      %s70 = sphi 0, %s70
      %s72 = sphi 0, %s70
      %s73 = sphi 0, %s72
      %s87 = sphi 0, %s73
      %s93 = sphi 0, %s95
      %s96 = sphi 0, %s93
      %s97 = sphi 0, %s96
      %s113 = sphi 0, %s97
    $region4: #{tpu_custom_call.1} parent=1 // loop_header_branch
      %18 = sbr.rel (%p16) target = $region8
    $region5: #{tpu_custom_call.1} parent=1 // loop_body
      %s20 = ssub.s32 %s15, 1
      %s21 = ssub.s32 %s15, 2
      %s22 = sadd.s32 %s15, 1
      %s23 = ssub.s32 %s15, %s22
      %p24 = scmp.eq.s32.totalorder %s23, 0
      %s26 = sadd.s32 %s25, 1
      %s27 = scalar_select %p24, %s25, %s26
      %p30 = pneg %p24
      %p31 = scmp.eq.s32.totalorder %s15, 1
      %p32 = por %p30, %p31
      %p33 = scmp.ne.s32.totalorder %s25, %s28
      %p34 = scmp.eq.s32.totalorder %s15, 0
      %p35 = por %p33, %p34
      %p36 = scmp.ne.s32.totalorder %s25, %s28
      %p37 = scmp.eq.s32.totalorder %s20, 1
      %p38 = por %p36, %p37
      %p39 = scmp.ne.s32.totalorder %s28, %s29
      %p40 = scmp.eq.s32.totalorder %s20, 0
      %p41 = por %p39, %p40
      %p42 = scmp.ne.s32.totalorder %s28, %s29
      %p43 = scmp.eq.s32.totalorder %s21, 1
      %p44 = por %p42, %p43
      %p46 = scmp.ne.s32.totalorder %s29, %s45
      %p47 = scmp.eq.s32.totalorder %s21, 0
      %p48 = por %p46, %p47
      %s50 = sadd.s32 %s49, 1
      %p53 = scmp.eq.s32.totalorder %s15, 1
      %p54 = scmp.ne.s32.totalorder %s49, %s51
      %p55 = scmp.eq.s32.totalorder %s15, 0
      %p56 = por %p54, %p55
      %p57 = scmp.ne.s32.totalorder %s49, %s51
      %p58 = scmp.eq.s32.totalorder %s20, 1
      %p59 = por %p57, %p58
      %p60 = scmp.ne.s32.totalorder %s51, %s52
      %p61 = scmp.eq.s32.totalorder %s20, 0
      %p62 = por %p60, %p61
      %p63 = scmp.ne.s32.totalorder %s51, %s52
      %p64 = scmp.eq.s32.totalorder %s21, 1
      %p65 = por %p63, %p64
      %p67 = scmp.ne.s32.totalorder %s52, %s66
      %p68 = scmp.eq.s32.totalorder %s21, 0
      %p69 = por %p67, %p68
      %s71 = sadd.s32 %s70, 1
      %p74 = scmp.eq.s32.totalorder %s15, 1
      %p75 = scmp.ne.s32.totalorder %s70, %s72
      %p76 = scmp.eq.s32.totalorder %s15, 0
      %p77 = por %p75, %p76
      %p78 = scmp.ne.s32.totalorder %s70, %s72
      %p79 = scmp.eq.s32.totalorder %s20, 1
      %p80 = por %p78, %p79
      %p81 = scmp.ne.s32.totalorder %s72, %s73
      %p82 = scmp.eq.s32.totalorder %s20, 0
      %p83 = por %p81, %p82
      %p84 = scmp.ne.s32.totalorder %s72, %s73
      %p85 = scmp.eq.s32.totalorder %s21, 1
      %p86 = por %p84, %p85
      %p88 = scmp.ne.s32.totalorder %s73, %s87
      %p89 = scmp.eq.s32.totalorder %s21, 0
      %p90 = por %p88, %p89
      %s91 = ssub.s32 %s15, %s22
      %p92 = scmp.eq.s32.totalorder %s91, 0
      %s94 = sadd.s32 %s93, 1
      %s95 = scalar_select %p92, %s93, %s94
      %p98 = pneg %p92
      %p99 = scmp.eq.s32.totalorder %s15, 1
      %p100 = por %p98, %p99
      %p101 = scmp.ne.s32.totalorder %s93, %s96
      %p102 = scmp.eq.s32.totalorder %s15, 0
      %p103 = por %p101, %p102
      %p104 = scmp.ne.s32.totalorder %s93, %s96
      %p105 = scmp.eq.s32.totalorder %s20, 1
      %p106 = por %p104, %p105
      %p107 = scmp.ne.s32.totalorder %s96, %s97
      %p108 = scmp.eq.s32.totalorder %s20, 0
      %p109 = por %p107, %p108
      %p110 = scmp.ne.s32.totalorder %s96, %s97
      %p111 = scmp.eq.s32.totalorder %s21, 1
      %p112 = por %p110, %p111
      %p114 = scmp.ne.s32.totalorder %s97, %s113
      %p115 = scmp.eq.s32.totalorder %s21, 0
      %p116 = por %p114, %p115
      %p117 = scmp.le.s32.totalorder 1, %s15
      %p118 = scmp.lt.s32.totalorder %s15, 3
      %p119 = pnand %p117, %p118
      %p120 = pneg %p119
      // Predicated region
      $region9: #{tpu_custom_call.1} parent=5 // pred_check
        _
      $region10: #{tpu_custom_call.1} parent=5 // pred_check_branch
        %122 = sbr.rel (%p119) target = $region12
      $region11: #{tpu_custom_call.1} parent=5 // pred_region
        %s123 = ssub.s32 %s15, 1
        // Predicated region
        $region13: #{tpu_custom_call.1} parent=11 // pred_check
          %p124 = pneg %p62
        $region14: #{tpu_custom_call.1} parent=11 // pred_check_branch
          %126 = sbr.rel (%p124) target = $region16
        $region15: #{tpu_custom_call.1} parent=11 // pred_region
          _
        $region16: #{tpu_custom_call.1} parent=11 // pred_fallthru
          _
        // Predicated region
        $region17: #{tpu_custom_call.1} parent=11 // pred_check
          %p127 = pneg %p83
        $region18: #{tpu_custom_call.1} parent=11 // pred_check_branch
          %129 = sbr.rel (%p127) target = $region20
        $region19: #{tpu_custom_call.1} parent=11 // pred_region
          _
        $region20: #{tpu_custom_call.1} parent=11 // pred_fallthru
          _
      $region12: #{tpu_custom_call.1} parent=5 // pred_fallthru
        _
      %p130 = scmp.lt.s32.totalorder %s15, 2
      // Predicated region
      $region21: #{tpu_custom_call.1} parent=5 // pred_check
        %p131 = pneg %p130
      $region22: #{tpu_custom_call.1} parent=5 // pred_check_branch
        %133 = sbr.rel (%p131) target = $region24
      $region23: #{tpu_custom_call.1} parent=5 // pred_region
        // Predicated region
        $region25: #{tpu_custom_call.1} parent=23 // pred_check
          %p134 = pneg %p35
        $region26: #{tpu_custom_call.1} parent=23 // pred_check_branch
          %136 = sbr.rel (%p134) target = $region28
        $region27: #{tpu_custom_call.1} parent=23 // pred_region
          %s137 = sand.u32 %s25, 1
          %s138 = scalar_lea.sflag [#allocation3], %s137
          %s139 = sand.u32 %s25, 1
          %s140 = smul.addr %s139, 16
          %s141 = scalar_lea.vmem [#allocation2], %s140
          %s143 = ssub.s32 256, 256
          %144 = vsyncadd %s138, %s143
          %s145 = smul.addr %s15, 2
          %s146 = smul.addr %s145, 128
          %s147 = scalar_lea.hbm %s0, %s146
          %s149 = sshll.u32 %s141, 4
          %s150 = int_to_ptr.vmem [resolvable:$true] %s149
          %152 = dma.hbm_to_vmem [thread:$0]  %s147, 256, %s150, %s138
        $region28: #{tpu_custom_call.1} parent=23 // pred_fallthru
          _
      $region24: #{tpu_custom_call.1} parent=5 // pred_fallthru
        _
      %p153 = scmp.le.s32.totalorder 1, %s15
      %p154 = scmp.lt.s32.totalorder %s15, 3
      %p155 = pnand %p153, %p154
      %p156 = pneg %p155
      // Predicated region
      $region29: #{tpu_custom_call.1} parent=5 // pred_check
        _
      $region30: #{tpu_custom_call.1} parent=5 // pred_check_branch
        %158 = sbr.rel (%p155) target = $region32
      $region31: #{tpu_custom_call.1} parent=5 // pred_region
        %s159 = ssub.s32 %s15, 1
        %s160 = sand.u32 %s28, 1
        %s161 = scalar_lea.sflag [#allocation3], %s160
        %s162 = sand.u32 %s28, 1
        %s163 = smul.addr %s162, 16
        %s164 = scalar_lea.vmem [#allocation2], %s163
        // Predicated region
        $region33: #{tpu_custom_call.1} parent=31 // pred_check
          %p165 = pneg %p41
        $region34: #{tpu_custom_call.1} parent=31 // pred_check_branch
          %167 = sbr.rel (%p165) target = $region36
        $region35: #{tpu_custom_call.1} parent=31 // pred_region
          %168 = dma.done %s161, 256
        $region36: #{tpu_custom_call.1} parent=31 // pred_fallthru
          _
        %s169 = sand.u32 %s28, 1
        %s170 = scalar_lea.sflag [#allocation3], %s169
        %s171 = sand.u32 %s28, 1
        %s172 = smul.addr %s171, 16
        %s173 = scalar_lea.vmem [#allocation2], %s172
        %p174 = pneg %p41
        %p175 = pneg %p38
        %p176 = pneg %p62
        %p177 = pneg %p59
        %p178 = pneg %p83
        %p179 = pneg %p80
        %p180 = pneg %p109
        %p181 = pneg %p106
        %s182 = sand.u32 %s96, 1
        %s183 = scalar_lea.sflag [#allocation4], %s182
        %s184 = sand.u32 %s96, 1
        %s185 = smul.addr %s184, 16
        %s186 = scalar_lea.vmem [#allocation5], %s185
        %v187 = vld [vmem:[%s164] sm:$0xff]
        %v188 = vadd.f32 %v187, 0.0
        %s189 = scalar_lea.vmem %s164, 8 [#allocation2]
        %v190 = vld [vmem:[%s189] sm:$0xff]
        %v191 = vadd.f32 %v188, %v190
        %v192 = vmax.f32 %v187, %v190
        %193 = vadd.xlane.f32.xlu0 %v191
        %v194 = vpop.xlane.xlu0 %193
        %195 = vmax.xlane.f32.xlu0 %v192
        %v196 = vpop.xlane.xlu0 %195
        %v197 = vmul.f32 %v194, 0.00390625
        %v198 = vld [vmem:[%s1] sm:$0x3]
        %v199 = vld [vmem:[%s2] sm:$0xff]
        %vm200 = vcmask 7168
        %v201 = vsel %vm200, %v197, %v196
        %vm202 = vcmask 64512
        %v204 = vsel %vm202, %v198, 0
        %206 = vmatprep.subr.mxu0 0.0
        %207 = vmatpush1.msra.mxu0 %v201
        %208 = vmatprep.subr.mxu0 0.0
        %209 = vmatpush1.msra.mxu0 0.0
        %210 = vmatprep.subr.mxu0 0.0
        %211 = vmatpush1.msra.mxu0 0.0
        %212 = vmatprep.subr.mxu0 0.0
        %213 = vmatpush1.msra.mxu0 0.0
        %214 = vmatprep.subr.mxu0 0.0
        %215 = vmatpush1.msra.mxu0 0.0
        %216 = vmatprep.subr.mxu0 0.0
        %217 = vmatpush1.msra.mxu0 0.0
        %218 = vmatprep.subr.mxu0 0.0
        %219 = vmatpush1.msra.mxu0 0.0
        %220 = vmatprep.subr.mxu0 0.0
        %221 = vmatpush1.msra.mxu0 0.0
        %222 = vmatprep.subr.mxu0 0.0
        %223 = vmatpush1.msra.mxu0 0.0
        %224 = vmatprep.subr.mxu0 0.0
        %225 = vmatpush1.msra.mxu0 0.0
        %226 = vmatprep.subr.mxu0 0.0
        %227 = vmatpush1.msra.mxu0 0.0
        %228 = vmatprep.subr.mxu0 0.0
        %229 = vmatpush1.msra.mxu0 0.0
        %230 = vmatprep.subr.mxu0 0.0
        %231 = vmatpush1.msra.mxu0 0.0
        %232 = vmatprep.subr.mxu0 0.0
        %233 = vmatpush1.msra.mxu0 0.0
        %234 = vmatprep.subr.mxu0 0.0
        %235 = vmatpush1.msra.mxu0 0.0
        %236 = vmatprep.subr.mxu0 0.0
        %237 = vmatpush1.msra.mxu0 0.0
        %238 = vmatprep.subr.mxu0 0.0
        %239 = vmatpush1.msra.mxu0 0.0
        %240 = vmatprep.subr.mxu0 0.0
        %241 = vmatpush1.msra.mxu0 0.0
        %242 = vmatprep.subr.mxu0 0.0
        %243 = vmatpush1.msra.mxu0 0.0
        %244 = vmatprep.subr.mxu0 0.0
        %245 = vmatpush1.msra.mxu0 0.0
        %246 = vmatprep.subr.mxu0 0.0
        %247 = vmatpush1.msra.mxu0 0.0
        %248 = vmatprep.subr.mxu0 0.0
        %249 = vmatpush1.msra.mxu0 0.0
        %250 = vmatprep.subr.mxu0 0.0
        %251 = vmatpush1.msra.mxu0 0.0
        %252 = vmatprep.subr.mxu0 0.0
        %253 = vmatpush1.msra.mxu0 0.0
        %254 = vmatprep.subr.mxu0 0.0
        %255 = vmatpush1.msra.mxu0 0.0
        %256 = vmatprep.subr.mxu0 0.0
        %257 = vmatpush1.msra.mxu0 0.0
        %258 = vmatprep.subr.mxu0 0.0
        %259 = vmatpush1.msra.mxu0 0.0
        %260 = vmatprep.subr.mxu0 0.0
        %261 = vmatpush1.msra.mxu0 0.0
        %262 = vmatprep.subr.mxu0 0.0
        %263 = vmatpush1.msra.mxu0 0.0
        %264 = vmatprep.subr.mxu0 0.0
        %265 = vmatpush1.msra.mxu0 0.0
        %266 = vmatprep.subr.mxu0 0.0
        %267 = vmatpush1.msra.mxu0 0.0
        %268 = vmatprep.subr.mxu0 0.0
        %269 = vmatpush1.msra.mxu0 0.0
        %270 = vmatprep.mubr.f32.mxu0 0.0
        %271 = vmatmul.mubr.f32.gmra.mrb[0].mxu0 %v204
        %v272 = vpop.f32.mrb[0].mxu0
        %v273 = vadd.f32 0.0, %v272
        %v274 = vpop.f32.mrb[0].mxu0
        %275 = vdwg.mxu0
        %v276 = vmax.f32 %v273, 0.0
        %vm277 = vcmp.ne.f32.partialorder %v273, %v273
        %v278 = vadd.f32 %v273, 0.0
        %v279 = vand.u32 2147483647, %v273
        %v280 = vsub.f32 0.0, %v279
        %v281 = vmul.f32 %v280, 1.442695
        %v282 = vpow.pop %v281
        %v283 = vadd.f32 %v282, 1.0
        %v284 = vlog2.pop %v283
        %v285 = vmul.f32 %v284, 0.6931472
        %v286 = vmul.f32 -0.5, %v282
        %v287 = vadd.f32 %v286, 1.0
        %v288 = vmul.f32 %v287, %v282
        %v289 = vand.u32 2147483647, %v282
        %vm290 = vcmp.lt.f32.partialorder %v289, 0.0004427343
        %v291 = vsel %vm290, %v288, %v285
        %v292 = vadd.f32 %v276, %v291
        %v293 = vsel %vm277, %v278, %v292
        %v294 = vtanh.pop %v293
        %v295 = vmul.f32 %v273, %v294
        %vm296 = vcmask 15360
        %v298 = vsel %vm296, %v199, 0
        %vm300 = vcmask 1041408
        %v302 = vsel %vm300, %v295, 0
        %304 = vmatprep.subr.mxu0 0.0
        %305 = vmatpush1.msra.mxu0 %v302
        %306 = vmatprep.subr.mxu0 0.0
        %307 = vmatpush1.msra.mxu0 0.0
        %308 = vmatprep.subr.mxu0 0.0
        %309 = vmatpush1.msra.mxu0 0.0
        %310 = vmatprep.subr.mxu0 0.0
        %311 = vmatpush1.msra.mxu0 0.0
        %312 = vmatprep.subr.mxu0 0.0
        %313 = vmatpush1.msra.mxu0 0.0
        %314 = vmatprep.subr.mxu0 0.0
        %315 = vmatpush1.msra.mxu0 0.0
        %316 = vmatprep.subr.mxu0 0.0
        %317 = vmatpush1.msra.mxu0 0.0
        %318 = vmatprep.subr.mxu0 0.0
        %319 = vmatpush1.msra.mxu0 0.0
        %320 = vmatprep.subr.mxu0 0.0
        %321 = vmatpush1.msra.mxu0 0.0
        %322 = vmatprep.subr.mxu0 0.0
        %323 = vmatpush1.msra.mxu0 0.0
        %324 = vmatprep.subr.mxu0 0.0
        %325 = vmatpush1.msra.mxu0 0.0
        %326 = vmatprep.subr.mxu0 0.0
        %327 = vmatpush1.msra.mxu0 0.0
        %328 = vmatprep.subr.mxu0 0.0
        %329 = vmatpush1.msra.mxu0 0.0
        %330 = vmatprep.subr.mxu0 0.0
        %331 = vmatpush1.msra.mxu0 0.0
        %332 = vmatprep.subr.mxu0 0.0
        %333 = vmatpush1.msra.mxu0 0.0
        %334 = vmatprep.subr.mxu0 0.0
        %335 = vmatpush1.msra.mxu0 0.0
        %336 = vmatprep.subr.mxu0 0.0
        %337 = vmatpush1.msra.mxu0 0.0
        %338 = vmatprep.subr.mxu0 0.0
        %339 = vmatpush1.msra.mxu0 0.0
        %340 = vmatprep.subr.mxu0 0.0
        %341 = vmatpush1.msra.mxu0 0.0
        %342 = vmatprep.subr.mxu0 0.0
        %343 = vmatpush1.msra.mxu0 0.0
        %344 = vmatprep.subr.mxu0 0.0
        %345 = vmatpush1.msra.mxu0 0.0
        %346 = vmatprep.subr.mxu0 0.0
        %347 = vmatpush1.msra.mxu0 0.0
        %348 = vmatprep.subr.mxu0 0.0
        %349 = vmatpush1.msra.mxu0 0.0
        %350 = vmatprep.subr.mxu0 0.0
        %351 = vmatpush1.msra.mxu0 0.0
        %352 = vmatprep.subr.mxu0 0.0
        %353 = vmatpush1.msra.mxu0 0.0
        %354 = vmatprep.subr.mxu0 0.0
        %355 = vmatpush1.msra.mxu0 0.0
        %356 = vmatprep.subr.mxu0 0.0
        %357 = vmatpush1.msra.mxu0 0.0
        %358 = vmatprep.subr.mxu0 0.0
        %359 = vmatpush1.msra.mxu0 0.0
        %360 = vmatprep.subr.mxu0 0.0
        %361 = vmatpush1.msra.mxu0 0.0
        %362 = vmatprep.subr.mxu0 0.0
        %363 = vmatpush1.msra.mxu0 0.0
        %364 = vmatprep.subr.mxu0 0.0
        %365 = vmatpush1.msra.mxu0 0.0
        %366 = vmatprep.subr.mxu0 0.0
        %367 = vmatpush1.msra.mxu0 0.0
        %368 = vmatprep.mubr.f32.mxu0 0.0
        %369 = vmatmul.mubr.f32.gmra.mrb[0].mxu0 %v298
        %v370 = vpop.f32.mrb[0].mxu0
        %v371 = vadd.f32 0.0, %v370
        %v372 = vpop.f32.mrb[0].mxu0
        %373 = vdwg.mxu0
        %v374 = vxor.u32 %v371, 2147483648
        %v375 = vmul.f32 %v374, 1.442695
        %v376 = vpow.pop %v375
        %v377 = vadd.f32 %v376, 1.0
        %v378 = vrcp.pop %v377
        %v379 = vmul.f32 1.0, %v378
        %381 = vrot.lane.b32.xlu0 %v379, 127
        %v382 = vpop.permute.xlu0 %381
        %v384 = vadd.f32 %v379, %v382
        %v385 = vxor.u32 %v384, 2147483648
        %v386 = vmul.f32 %v385, 1.442695
        %v387 = vpow.pop %v386
        %v388 = vadd.f32 %v387, 1.0
        %v389 = vrcp.pop %v388
        %v390 = vmul.f32 1.0, %v389
        %392 = vset.pattern.permute.xlu0 0
        %393 = vperm.xlu0 %392, %v390
        %v394 = vpop.permute.xlu0 %393
        %v396 = vmul.f32 %v187, %v394
        %397 = vst [vmem:[%s186] sm:$0xff] %v396
        %v398 = vld [vmem:[%s189] sm:$0xff]
        %v399 = vmul.f32 %v398, %v394
        %s400 = scalar_lea.vmem %s186, 8 [#allocation5]
        %401 = vst [vmem:[%s400] sm:$0xff] %v399
        %s402 = sand.u32 %s96, 1
        %s403 = scalar_lea.sflag [#allocation4], %s402
        %s404 = sand.u32 %s96, 1
        %s405 = smul.addr %s404, 16
        %s406 = scalar_lea.vmem [#allocation5], %s405
        // Predicated region
        $region37: #{tpu_custom_call.1} parent=31 // pred_check
          %p407 = pneg %p106
        $region38: #{tpu_custom_call.1} parent=31 // pred_check_branch
          %409 = sbr.rel (%p407) target = $region40
        $region39: #{tpu_custom_call.1} parent=31 // pred_region
          %s411 = ssub.s32 256, 256
          %412 = vsyncadd %s403, %s411
          %s413 = smul.addr %s20, 2
          %s414 = smul.addr %s413, 128
          %s415 = scalar_lea.hbm %s3, %s414
          %s417 = sshll.u32 %s406, 4
          %s418 = int_to_ptr.vmem [resolvable:$true] %s417
          %420 = dma.vmem_to_hbm [thread:$0]  %s418, 256, %s415, %s403
        $region40: #{tpu_custom_call.1} parent=31 // pred_fallthru
          _
      $region32: #{tpu_custom_call.1} parent=5 // pred_fallthru
        _
      %p421 = scmp.le.s32.totalorder 2, %s15
      // Predicated region
      $region41: #{tpu_custom_call.1} parent=5 // pred_check
        %p422 = pneg %p421
      $region42: #{tpu_custom_call.1} parent=5 // pred_check_branch
        %424 = sbr.rel (%p422) target = $region44
      $region43: #{tpu_custom_call.1} parent=5 // pred_region
        %s425 = ssub.s32 %s15, 2
        // Predicated region
        $region45: #{tpu_custom_call.1} parent=43 // pred_check
          %p426 = pneg %p112
        $region46: #{tpu_custom_call.1} parent=43 // pred_check_branch
          %428 = sbr.rel (%p426) target = $region48
        $region47: #{tpu_custom_call.1} parent=43 // pred_region
          %s429 = sand.u32 %s97, 1
          %s430 = scalar_lea.sflag [#allocation4], %s429
          %s431 = sand.u32 %s97, 1
          %s432 = smul.addr %s431, 16
          %s433 = scalar_lea.vmem [#allocation5], %s432
          %434 = dma.done %s430, 256
        $region48: #{tpu_custom_call.1} parent=43 // pred_fallthru
          _
      $region44: #{tpu_custom_call.1} parent=5 // pred_fallthru
        _
    $region6: #{tpu_custom_call.1} parent=1 // loop_footer
      %s19 = sadd.s32 1, %s15
    $region7: #{tpu_custom_call.1} parent=1 // loop_footer_branch
      %14 = sbr.rel target = $region3
    $region8: #{tpu_custom_call.1} parent=1 // loop_exit
      _
    %435 = vsyncpa [#allocation3], 1
    %s436 = scalar_lea.sflag [#allocation3], 1
    %437 = vsyncpa %s436, 1
    %438 = vsyncpa [#allocation4], 1
    %s439 = scalar_lea.sflag [#allocation4], 1
    %440 = vsyncpa %s439, 1

</llo_original>
